<compile_context>
chip_gen: v5e
topology: v5e:2x2
jax: 0.10.0
libtpu: 0.0.40
codegen_flags: <defaults>
</compile_context>

<pallas_src>
import functools

import numpy as np

import jax
import jax.numpy as jnp
from jax import lax
from jax.experimental import pallas as pl
from jax.experimental.pallas import tpu as pltpu


def _round_up(x, m):
    return ((x + m - 1) // m) * m


def _focal_kernel(preds_ref, labels_ref, out_ref, acc_ref, *,
                  gamma, alpha, hw, padded):
    s = pl.program_id(1)
    t = pl.program_id(2)
    num_t = pl.num_programs(2)

    @pl.when(t == 0)
    def _():
        acc_ref[...] = jnp.zeros_like(acc_ref)

    labels = labels_ref[...]                         # (R, 128) int
    r_tile, lanes = labels.shape
    num_classes = preds_ref.shape[0]

    # Per-class dense pixel planes; class axis unrolled in Python (C is tiny).
    planes = [preds_ref[c].astype(jnp.float32) for c in range(num_classes)]

    # log-softmax pieces via elementwise ops across the unrolled class axis.
    m = planes[0]
    for c in range(1, num_classes):
        m = jnp.maximum(m, planes[c])
    shifted = [p - m for p in planes]
    exps = [jnp.exp(v) for v in shifted]
    sumexp = exps[0]
    for c in range(1, num_classes):
        sumexp = sumexp + exps[c]

    # Gather-at-label via nested selects (C-1 shared compares); alpha baked in.
    eqs = [labels == c for c in range(num_classes - 1)]
    shifted_t = shifted[num_classes - 1]
    exp_t = exps[num_classes - 1]
    alpha_t = jnp.float32(alpha[num_classes - 1])
    for c in range(num_classes - 2, -1, -1):
        shifted_t = jnp.where(eqs[c], shifted[c], shifted_t)
        exp_t = jnp.where(eqs[c], exps[c], exp_t)
        alpha_t = jnp.where(eqs[c], jnp.float32(alpha[c]), alpha_t)

    logp_t = shifted_t - jnp.log(sumexp)
    p_t = exp_t / sumexp               # reuse exp(shifted): no extra exp/pixel

    one_m_p = 1.0 - p_t
    if isinstance(gamma, int):
        focal_w = lax.integer_pow(one_m_p, gamma)
    else:
        focal_w = jnp.power(one_m_p, jnp.float32(gamma))

    loss = -alpha_t * focal_w * logp_t               # (R, 128)

    if padded:
        tile_pix = r_tile * lanes
        tile_start = (s * num_t + t) * tile_pix
        is_ragged = (tile_start + tile_pix) > hw

        @pl.when(is_ragged)
        def _():
            # select (not multiply) so NaN/Inf in padded lanes never leaks
            row_ids = lax.broadcasted_iota(jnp.int32, (r_tile, lanes), 0)
            lane_ids = lax.broadcasted_iota(jnp.int32, (r_tile, lanes), 1)
            pix = tile_start + row_ids * lanes + lane_ids
            acc_ref[...] += jnp.where(pix < hw, loss, 0.0)

        @pl.when(jnp.logical_not(is_ragged))
        def _():
            acc_ref[...] += loss
    else:
        acc_ref[...] += loss

    @pl.when(t == num_t - 1)
    def _():
        out_ref[...] = jnp.sum(acc_ref[...]).reshape(1, 1, 1, 1)


def focal_loss_pallas(preds, labels, alpha_vec, *, gamma=2, size_average=True,
                      tile_hw=65536, num_splits=None):
    """preds: [B, C, H, W] float, labels: [B, H, W] int, alpha_vec: [C] float."""
    B, C, H, W = preds.shape
    assert labels.shape == (B, H, W)
    HW = H * W
    N = B * HW

    if not jnp.issubdtype(labels.dtype, jnp.integer):
        labels = labels.astype(jnp.int32)

    # integral float gamma -> int so the kernel uses integer_pow, not exp(log())
    if isinstance(gamma, float) and float(gamma).is_integer():
        gamma = int(gamma)

    # alpha is module-init config: bake as Python constants (no input stream)
    alpha = tuple(float(a) for a in
                  np.asarray(jax.device_get(alpha_vec), dtype=np.float32).reshape(-1))
    assert len(alpha) == C

    # Dense pixel layout: [B, C, rows, 128] / [B, rows, 128] (free reshapes;
    # pad HW to a multiple of 128 only if required).
    HW_pad = _round_up(HW, 128)
    preds3 = preds.reshape(B, C, HW)
    labels2 = labels.reshape(B, HW)
    if HW_pad != HW:
        preds3 = jnp.pad(preds3, ((0, 0), (0, 0), (0, HW_pad - HW)))
        labels2 = jnp.pad(labels2, ((0, 0), (0, HW_pad - HW)))
    rows = HW_pad // 128
    preds4 = preds3.reshape(B, C, rows, 128)
    labels3 = labels2.reshape(B, rows, 128)

    # Row tile: multiple of 8 sublanes (or the whole row extent) ~ tile_hw px.
    desired_rows = max(8, _round_up(max(tile_hw, 128) // 128, 8))
    if rows <= desired_rows:
        r_tile = rows
        num_tiles = 1
    else:
        r_tile = desired_rows
        num_tiles = pl.cdiv(rows, r_tile)

    # Optional parallel split of the pixel range (keeps v7x's 2nd TC busy when
    # B is small); no effect on single-TC v5e/v6e.
    if num_splits is None:
        num_splits = 2 if (B == 1 and num_tiles >= 2) else 1
    num_splits = max(1, min(num_splits, num_tiles))
    tiles_per_split = pl.cdiv(num_tiles, num_splits)

    covered = num_splits * tiles_per_split * r_tile * 128   # pixels covered/batch
    padded = covered > HW

    kernel = functools.partial(_focal_kernel, gamma=gamma, alpha=alpha,
                               hw=HW, padded=padded)

    partials = pl.pallas_call(
        kernel,
        out_shape=jax.ShapeDtypeStruct((B, num_splits, 1, 1), jnp.float32),
        grid_spec=pltpu.PrefetchScalarGridSpec(
            num_scalar_prefetch=0,
            grid=(B, num_splits, tiles_per_split),
            in_specs=[
                # logits tile: class axis leading, dense (rows,128) pixel planes
                pl.BlockSpec((None, C, r_tile, 128),
                             lambda b, s, t: (b, 0, s * tiles_per_split + t, 0)),
                # labels tile: dense (rows,128)
                pl.BlockSpec((None, r_tile, 128),
                             lambda b, s, t: (b, s * tiles_per_split + t, 0)),
            ],
            out_specs=pl.BlockSpec((1, 1, 1, 1),
                                   lambda b, s, t: (b, s, 0, 0)),
            scratch_shapes=[pltpu.VMEM((r_tile, 128), jnp.float32)],
        ),
        compiler_params=pltpu.CompilerParams(
            dimension_semantics=("parallel", "parallel", "arbitrary")),
    )(preds4, labels3)

    # Tiny epilogue in plain JAX: sum the B*S per-(batch,split) partials.
    total = jnp.sum(partials)
    if size_average:
        return total / jnp.float32(N)
    return total


def _focal_loss_ref(preds, labels, alpha_vec, gamma=2, size_average=True):
    B, C, H, W = preds.shape
    x = jnp.transpose(preds, (0, 2, 3, 1)).reshape(-1, C).astype(jnp.float32)
    y = labels.reshape(-1).astype(jnp.int32)
    logsoft = jax.nn.log_softmax(x, axis=1)
    soft = jnp.exp(logsoft)
    p_t = soft[jnp.arange(x.shape[0]), y]
    logp_t = logsoft[jnp.arange(x.shape[0]), y]
    a_t = jnp.asarray(alpha_vec, jnp.float32)[y]
    loss = -a_t * (1.0 - p_t) ** gamma * logp_t
    return jnp.mean(loss) if size_average else jnp.sum(loss)


if __name__ == "__main__":
    # Module config (matches Focal_loss defaults)
    alpha_scalar = 0.25
    gamma = 2
    num_classes = 3

    # alpha vector built exactly like __init__: alpha[0]=0.25, alpha[1:]=0.75
    alpha_vec = jnp.concatenate([
        jnp.array([alpha_scalar], dtype=jnp.float32),
        jnp.full((num_classes - 1,), 1.0 - alpha_scalar, dtype=jnp.float32),
    ])

    key = jax.random.PRNGKey(0)

    # Primary case: B=2, C=3, 16x16, mean reduction.
    B, H, W = 2, 16, 16
    kp, kl = jax.random.split(key)
    preds = jax.random.normal(kp, (B, num_classes, H, W), dtype=jnp.float32)
    labels = jax.random.randint(kl, (B, H, W), 0, num_classes, dtype=jnp.int32)
    loss = jax.block_until_ready(
        focal_loss_pallas(preds, labels, alpha_vec, gamma=gamma, size_average=True))
    ref = _focal_loss_ref(preds, labels, alpha_vec, gamma, True)
    assert jnp.allclose(loss, ref, rtol=1e-5, atol=1e-6), (loss, ref)

    # Ragged HW (10*13=130, not a multiple of 128): exercises pad + tail mask; sum.
    B2, H2, W2 = 2, 10, 13
    kp2, kl2 = jax.random.split(kl)
    preds2 = jax.random.normal(kp2, (B2, num_classes, H2, W2), dtype=jnp.float32)
    labels2 = jax.random.randint(kl2, (B2, H2, W2), 0, num_classes, dtype=jnp.int32)
    loss2 = jax.block_until_ready(
        focal_loss_pallas(preds2, labels2, alpha_vec, gamma=gamma, size_average=False))
    ref2 = _focal_loss_ref(preds2, labels2, alpha_vec, gamma, False)
    assert jnp.allclose(loss2, ref2, rtol=1e-5, atol=1e-4), (loss2, ref2)

    # Multi-tile reduction + parallel pixel-split path (B=1, forced small tile).
    B3, H3, W3 = 1, 64, 64
    kp3, kl3 = jax.random.split(kl2)
    preds3 = jax.random.normal(kp3, (B3, num_classes, H3, W3), dtype=jnp.float32)
    labels3 = jax.random.randint(kl3, (B3, H3, W3), 0, num_classes, dtype=jnp.int32)
    loss3 = jax.block_until_ready(
        focal_loss_pallas(preds3, labels3, alpha_vec, gamma=gamma,
                          size_average=True, tile_hw=1024))
    ref3 = _focal_loss_ref(preds3, labels3, alpha_vec, gamma, True)
    assert jnp.allclose(loss3, ref3, rtol=1e-5, atol=1e-6), (loss3, ref3)

    print("KERNEL_OK")
</pallas_src>

<mosaic_0001>
module attributes {stable_mosaic.version = 11 : i64} {
  func.func @_focal_kernel(%arg0: i32, %arg1: i32, %arg2: i32, %arg3: memref<1x3x2x128xf32, #tpu.memory_space<vmem>>, %arg4: memref<1x2x128xi32, #tpu.memory_space<vmem>>, %arg5: memref<1x1x1x1xf32, #tpu.memory_space<vmem>>, %arg6: memref<2x128xf32, #tpu.memory_space<vmem>>) attributes {dimension_semantics = [#tpu.dimension_semantics<parallel>, #tpu.dimension_semantics<parallel>, #tpu.dimension_semantics<arbitrary>], iteration_bounds = array<i64: 2, 1, 1>, scalar_prefetch = 0 : i64, scratch_operands = 1 : i64, tpu.core_type = #tpu.core_type<tc>, window_params = [{transform_indices = @transform_0, window_bounds = array<i64: 1, 3, 2, 128>}, {transform_indices = @transform_1, window_bounds = array<i64: 1, 2, 128>}, {transform_indices = @transform_2, window_bounds = array<i64: 1, 1, 1, 1>}]} {
    %c0_i32 = arith.constant 0 : i32
    %0 = arith.cmpi eq, %arg2, %c0_i32 : i32
    %1 = arith.extui %0 : i1 to i32
    %c0_i32_0 = arith.constant 0 : i32
    %2 = arith.cmpi ne, %1, %c0_i32_0 : i32
    scf.if %2 {
      %cst_24 = arith.constant 0.000000e+00 : f32
      %50 = vector.broadcast %cst_24 : f32 to vector<2x128xf32>
      %c0_25 = arith.constant 0 : index
      %c0_26 = arith.constant 0 : index
      %51 = vector.load %arg6[%c0_25, %c0_26] : memref<2x128xf32, #tpu.memory_space<vmem>>, vector<2x128xf32>
      tpu.vector_store %arg6[%c0_25, %c0_26], %50 {strides = array<i32>} : memref<2x128xf32, #tpu.memory_space<vmem>>, vector<2x128xf32>,
    } else {
    }
    %c0 = arith.constant 0 : index
    %c0_1 = arith.constant 0 : index
    %c0_2 = arith.constant 0 : index
    %3 = vector.load %arg4[%c0, %c0_1, %c0_2] : memref<1x2x128xi32, #tpu.memory_space<vmem>>, vector<1x2x128xi32>
    %4 = vector.shape_cast %3 : vector<1x2x128xi32> to vector<2x128xi32>
    %c0_3 = arith.constant 0 : index
    %c0_4 = arith.constant 0 : index
    %c0_5 = arith.constant 0 : index
    %c0_6 = arith.constant 0 : index
    %5 = vector.load %arg3[%c0_3, %c0_4, %c0_5, %c0_6] : memref<1x3x2x128xf32, #tpu.memory_space<vmem>>, vector<1x1x2x128xf32>
    %6 = vector.shape_cast %5 : vector<1x1x2x128xf32> to vector<2x128xf32>
    %c0_7 = arith.constant 0 : index
    %c1 = arith.constant 1 : index
    %c0_8 = arith.constant 0 : index
    %c0_9 = arith.constant 0 : index
    %7 = vector.load %arg3[%c0_7, %c1, %c0_8, %c0_9] : memref<1x3x2x128xf32, #tpu.memory_space<vmem>>, vector<1x1x2x128xf32>
    %8 = vector.shape_cast %7 : vector<1x1x2x128xf32> to vector<2x128xf32>
    %c0_10 = arith.constant 0 : index
    %c2 = arith.constant 2 : index
    %c0_11 = arith.constant 0 : index
    %c0_12 = arith.constant 0 : index
    %9 = vector.load %arg3[%c0_10, %c2, %c0_11, %c0_12] : memref<1x3x2x128xf32, #tpu.memory_space<vmem>>, vector<1x1x2x128xf32>
    %10 = vector.shape_cast %9 : vector<1x1x2x128xf32> to vector<2x128xf32>
    %11 = arith.maximumf %6, %8 : vector<2x128xf32>
    %12 = arith.maximumf %11, %10 : vector<2x128xf32>
    %13 = arith.subf %6, %12 : vector<2x128xf32>
    %14 = arith.subf %8, %12 : vector<2x128xf32>
    %15 = arith.subf %10, %12 : vector<2x128xf32>
    %16 = math.exp %13 : vector<2x128xf32>
    %17 = math.exp %14 : vector<2x128xf32>
    %18 = math.exp %15 : vector<2x128xf32>
    %19 = arith.addf %16, %17 : vector<2x128xf32>
    %20 = arith.addf %19, %18 : vector<2x128xf32>
    %c0_i32_13 = arith.constant 0 : i32
    %21 = vector.broadcast %c0_i32_13 : i32 to vector<2x128xi32>
    %22 = arith.cmpi eq, %4, %21 : vector<2x128xi32>
    %c1_i32 = arith.constant 1 : i32
    %23 = vector.broadcast %c1_i32 : i32 to vector<2x128xi32>
    %24 = arith.cmpi eq, %4, %23 : vector<2x128xi32>
    %25 = arith.select %24, %14, %15 : vector<2x128xi1>, vector<2x128xf32>
    %26 = arith.select %24, %17, %18 : vector<2x128xi1>, vector<2x128xf32>
    %cst = arith.constant 7.500000e-01 : f32
    %cst_14 = arith.constant 7.500000e-01 : f32
    %27 = vector.broadcast %cst : f32 to vector<2x128xf32>
    %28 = vector.broadcast %cst_14 : f32 to vector<2x128xf32>
    %29 = arith.select %24, %27, %28 : vector<2x128xi1>, vector<2x128xf32>
    %30 = arith.select %22, %13, %25 : vector<2x128xi1>, vector<2x128xf32>
    %31 = arith.select %22, %16, %26 : vector<2x128xi1>, vector<2x128xf32>
    %cst_15 = arith.constant 2.500000e-01 : f32
    %32 = vector.broadcast %cst_15 : f32 to vector<2x128xf32>
    %33 = arith.select %22, %32, %29 : vector<2x128xi1>, vector<2x128xf32>
    %34 = math.log %20 : vector<2x128xf32>
    %35 = arith.subf %30, %34 : vector<2x128xf32>
    %36 = arith.divf %31, %20 : vector<2x128xf32>
    %cst_16 = arith.constant 1.000000e+00 : f32
    %37 = vector.broadcast %cst_16 : f32 to vector<2x128xf32>
    %38 = arith.subf %37, %36 : vector<2x128xf32>
    %39 = arith.mulf %38, %38 : vector<2x128xf32>
    %cst_17 = arith.constant 0.000000e+00 : f32
    %40 = vector.broadcast %cst_17 : f32 to vector<2x128xf32>
    %41 = arith.subf %40, %33 : vector<2x128xf32>
    %42 = arith.mulf %41, %39 : vector<2x128xf32>
    %43 = arith.mulf %42, %35 : vector<2x128xf32>
    %c0_18 = arith.constant 0 : index
    %c0_19 = arith.constant 0 : index
    %44 = vector.load %arg6[%c0_18, %c0_19] : memref<2x128xf32, #tpu.memory_space<vmem>>, vector<2x128xf32>
    %45 = arith.addf %44, %43 : vector<2x128xf32>
    %c0_20 = arith.constant 0 : index
    %c0_21 = arith.constant 0 : index
    %46 = vector.load %arg6[%c0_20, %c0_21] : memref<2x128xf32, #tpu.memory_space<vmem>>, vector<2x128xf32>
    tpu.vector_store %arg6[%c0_20, %c0_21], %45 {strides = array<i32>} : memref<2x128xf32, #tpu.memory_space<vmem>>, vector<2x128xf32>,
    %c0_i32_22 = arith.constant 0 : i32
    %47 = arith.cmpi eq, %arg2, %c0_i32_22 : i32
    %48 = arith.extui %47 : i1 to i32
    %c0_i32_23 = arith.constant 0 : i32
    %49 = arith.cmpi ne, %48, %c0_i32_23 : i32
    scf.if %49 {
      %c0_24 = arith.constant 0 : index
      %c0_25 = arith.constant 0 : index
      %50 = vector.load %arg6[%c0_24, %c0_25] : memref<2x128xf32, #tpu.memory_space<vmem>>, vector<2x128xf32>
      %51 = vector.shape_cast %50 : vector<2x128xf32> to vector<1x2x128xf32>
      %cst_26 = arith.constant dense<0.000000e+00> : vector<1xf32>
      %52 = vector.multi_reduction <add>, %51, %cst_26 [1, 2] : vector<1x2x128xf32> to vector<1xf32>
      %53 = vector.shape_cast %52 : vector<1xf32> to vector<1x1x1xf32>
      %54 = vector.extract %53[0, 0, 0] : f32 from vector<1x1x1xf32>
      %55 = vector.broadcast %54 : f32 to vector<1x1x1x1xf32>
      %c0_27 = arith.constant 0 : index
      %c0_28 = arith.constant 0 : index
      %c0_29 = arith.constant 0 : index
      %c0_30 = arith.constant 0 : index
      %56 = vector.load %arg5[%c0_27, %c0_28, %c0_29, %c0_30] : memref<1x1x1x1xf32, #tpu.memory_space<vmem>>, vector<1x1x1x1xf32>
      tpu.vector_store %arg5[%c0_27, %c0_28, %c0_29, %c0_30], %55 {strides = array<i32>} : memref<1x1x1x1xf32, #tpu.memory_space<vmem>>, vector<1x1x1x1xf32>,
    } else {
    }
    return
  }
  func.func @transform_0(%arg0: i32, %arg1: i32, %arg2: i32) -> (i32, i32, i32, i32) {
    %c1_i32 = arith.constant 1 : i32
    %0 = arith.muli %arg1, %c1_i32 : i32
    %1 = arith.addi %0, %arg2 : i32
    %c0_i32 = arith.constant 0 : i32
    %c0_i32_0 = arith.constant 0 : i32
    %c0_i32_1 = arith.constant 0 : i32
    return %arg0, %c0_i32, %1, %c0_i32_0 : i32, i32, i32, i32
  }
  func.func @transform_1(%arg0: i32, %arg1: i32, %arg2: i32) -> (i32, i32, i32) {
    %c1_i32 = arith.constant 1 : i32
    %0 = arith.muli %arg1, %c1_i32 : i32
    %1 = arith.addi %0, %arg2 : i32
    %c0_i32 = arith.constant 0 : i32
    %c0_i32_0 = arith.constant 0 : i32
    return %arg0, %1, %c0_i32 : i32, i32, i32
  }
  func.func @transform_2(%arg0: i32, %arg1: i32, %arg2: i32) -> (i32, i32, i32, i32) {
    %c0_i32 = arith.constant 0 : i32
    %c0_i32_0 = arith.constant 0 : i32
    %c0_i32_1 = arith.constant 0 : i32
    return %arg0, %arg1, %c0_i32, %c0_i32_0 : i32, i32, i32, i32
  }
}

</mosaic_0001>

<llo_original>
// kernel: tpu_custom_call.1
$region0: #{tpu_custom_call.1}
  #allocation0 [shape = 'u32[]', space=smem, size = 0x4, offset = 0x4, fixed_abs, tag = 'smem constant byte address 0x4 - core index']
  #allocation1 [shape = 'u32[72,128]{1,0:T(1,128)}', space=vmem, size = 0x9000, scoped, tag = 'internal scratch']
  #allocation2 [shape = 'f32[2,128]{1,0:T(2,128)}', space=vmem, size = 0x400, scoped, tag = 'scratch operand']
  %s0 = inlined_call_operand.hbm [shape: f32[2,3,2,128], index: 0, kind: input, shape index: {}]
  %s1 = inlined_call_operand.hbm [shape: s32[2,2,128], index: 1, kind: input, shape index: {}]
  %s2 = inlined_call_operand.vmem [shape: f32[2,1,1,1], index: 2, kind: output, shape index: {}]
  %s3 = sld [smem:[#allocation0]]
  $region57: #{tpu_custom_call.1} parent=0
    _
  %s5 = ssub.s32 1, %s3
  %s6 = scalar_select 0, %s5, %s3
  $region1: #{tpu_custom_call.1} parent=0
    #allocation3 [shape = 'u8[6144]{0}', space=vmem, size = 0x1800, scoped, tag = 'input window, operand 0']
    #allocation4 [shape = 's32[2]{0}', space=sflag, size = 0x8, scoped, tag = 'scoped memory for tpu_custom_call.1']
    #allocation5 [shape = 'u8[2048]{0}', space=vmem, size = 0x800, scoped, tag = 'input window, operand 1']
    #allocation6 [shape = 's32[2]{0}', space=sflag, size = 0x8, scoped, tag = 'scoped memory for tpu_custom_call.1']
    %7 = vsyncpa [#allocation4], 0
    %s8 = scalar_lea.sflag [#allocation4], 1
    %9 = vsyncpa %s8, 0
    %10 = vsyncpa [#allocation6], 0
    %s11 = scalar_lea.sflag [#allocation6], 1
    %12 = vsyncpa %s11, 0
    loop: start=0, step=1, limit=4
    $region2: #{tpu_custom_call.1} parent=1 // loop_pre_header
      _
    $region3: #{tpu_custom_call.1} parent=1 // loop_header
      %s14 = sphi 0, %s18
      %p15 = scmp.ge.s32.totalorder %s14, 4
      %s21 = sphi 0, %s40
      %s22 = sphi 0, %s36
      %s23 = sphi 0, %s32
      %s24 = sphi 0, %s21
      %s25 = sphi 0, %s22
      %s26 = sphi 0, %s23
      %s27 = sphi 0, %s24
      %s28 = sphi 0, %s25
      %s29 = sphi 0, %s26
      %s47 = sphi 0, %s49
      %s50 = sphi 0, %s47
      %s51 = sphi 0, %s50
      %s67 = sphi 0, %s51
      %s77 = sphi 0, %s79
      %s80 = sphi 0, %s77
      %s81 = sphi 0, %s80
      %s97 = sphi 0, %s81
      %s105 = sphi 0, %s107
      %s108 = sphi 0, %s105
      %s109 = sphi 0, %s108
      %s125 = sphi 0, %s109
    $region4: #{tpu_custom_call.1} parent=1 // loop_header_branch
      %17 = sbr.rel (%p15) target = $region8
    $region5: #{tpu_custom_call.1} parent=1 // loop_body
      %s19 = ssub.s32 %s14, 1
      %s20 = ssub.s32 %s14, 2
      %s30 = sadd.s32 1, %s23
      %p31 = scmp.ge.s32.totalorder %s30, 1
      %s32 = scalar_select %p31, 0, %s30
      %s33 = sadd.s32 1, %s22
      %s34 = scalar_select %p31, %s33, %s22
      %p35 = scmp.ge.s32.totalorder %s34, 1
      %s36 = scalar_select %p35, 0, %s34
      %s37 = sadd.s32 1, %s21
      %s38 = scalar_select %p35, %s37, %s21
      %p39 = scmp.ge.s32.totalorder %s38, 2
      %s40 = scalar_select %p39, 0, %s38
      %s41 = sadd.s32 %s22, %s23
      %s42 = sadd.s32 %s36, %s32
      %s43 = ssub.s32 %s21, %s40
      %s44 = ssub.s32 %s41, %s42
      %s45 = sor.u32 %s43, %s44
      %p46 = scmp.eq.s32.totalorder %s45, 0
      %s48 = sadd.s32 %s47, 1
      %s49 = scalar_select %p46, %s47, %s48
      %p52 = pneg %p46
      %p53 = scmp.eq.s32.totalorder %s14, 1
      %p54 = por %p52, %p53
      %p55 = scmp.ne.s32.totalorder %s47, %s50
      %p56 = scmp.eq.s32.totalorder %s14, 0
      %p57 = por %p55, %p56
      %p58 = scmp.ne.s32.totalorder %s47, %s50
      %p59 = scmp.eq.s32.totalorder %s19, 1
      %p60 = por %p58, %p59
      %p61 = scmp.ne.s32.totalorder %s50, %s51
      %p62 = scmp.eq.s32.totalorder %s19, 0
      %p63 = por %p61, %p62
      %p64 = scmp.ne.s32.totalorder %s50, %s51
      %p65 = scmp.eq.s32.totalorder %s20, 1
      %p66 = por %p64, %p65
      %p68 = scmp.ne.s32.totalorder %s51, %s67
      %p69 = scmp.eq.s32.totalorder %s20, 0
      %p70 = por %p68, %p69
      %s71 = sadd.s32 %s22, %s23
      %s72 = sadd.s32 %s36, %s32
      %s73 = ssub.s32 %s21, %s40
      %s74 = ssub.s32 %s71, %s72
      %s75 = sor.u32 %s73, %s74
      %p76 = scmp.eq.s32.totalorder %s75, 0
      %s78 = sadd.s32 %s77, 1
      %s79 = scalar_select %p76, %s77, %s78
      %p82 = pneg %p76
      %p83 = scmp.eq.s32.totalorder %s14, 1
      %p84 = por %p82, %p83
      %p85 = scmp.ne.s32.totalorder %s77, %s80
      %p86 = scmp.eq.s32.totalorder %s14, 0
      %p87 = por %p85, %p86
      %p88 = scmp.ne.s32.totalorder %s77, %s80
      %p89 = scmp.eq.s32.totalorder %s19, 1
      %p90 = por %p88, %p89
      %p91 = scmp.ne.s32.totalorder %s80, %s81
      %p92 = scmp.eq.s32.totalorder %s19, 0
      %p93 = por %p91, %p92
      %p94 = scmp.ne.s32.totalorder %s80, %s81
      %p95 = scmp.eq.s32.totalorder %s20, 1
      %p96 = por %p94, %p95
      %p98 = scmp.ne.s32.totalorder %s81, %s97
      %p99 = scmp.eq.s32.totalorder %s20, 0
      %p100 = por %p98, %p99
      %s101 = ssub.s32 %s21, %s40
      %s102 = ssub.s32 %s22, %s36
      %s103 = sor.u32 %s101, %s102
      %p104 = scmp.eq.s32.totalorder %s103, 0
      %s106 = sadd.s32 %s105, 1
      %s107 = scalar_select %p104, %s105, %s106
      %p110 = pneg %p104
      %p111 = scmp.eq.s32.totalorder %s14, 1
      %p112 = por %p110, %p111
      %p113 = scmp.ne.s32.totalorder %s105, %s108
      %p114 = scmp.eq.s32.totalorder %s14, 0
      %p115 = por %p113, %p114
      %p116 = scmp.ne.s32.totalorder %s105, %s108
      %p117 = scmp.eq.s32.totalorder %s19, 1
      %p118 = por %p116, %p117
      %p119 = scmp.ne.s32.totalorder %s108, %s109
      %p120 = scmp.eq.s32.totalorder %s19, 0
      %p121 = por %p119, %p120
      %p122 = scmp.ne.s32.totalorder %s108, %s109
      %p123 = scmp.eq.s32.totalorder %s20, 1
      %p124 = por %p122, %p123
      %p126 = scmp.ne.s32.totalorder %s109, %s125
      %p127 = scmp.eq.s32.totalorder %s20, 0
      %p128 = por %p126, %p127
      %p129 = scmp.le.s32.totalorder 1, %s14
      %p130 = scmp.lt.s32.totalorder %s14, 3
      %p131 = pnand %p129, %p130
      %p132 = pneg %p131
      // Predicated region
      $region9: #{tpu_custom_call.1} parent=5 // pred_check
        _
      $region10: #{tpu_custom_call.1} parent=5 // pred_check_branch
        %134 = sbr.rel (%p131) target = $region12
      $region11: #{tpu_custom_call.1} parent=5 // pred_region
        %s135 = ssub.s32 %s14, 1
      $region12: #{tpu_custom_call.1} parent=5 // pred_fallthru
        _
      %p136 = scmp.lt.s32.totalorder %s14, 2
      // Predicated region
      $region13: #{tpu_custom_call.1} parent=5 // pred_check
        %p137 = pneg %p136
      $region14: #{tpu_custom_call.1} parent=5 // pred_check_branch
        %139 = sbr.rel (%p137) target = $region16
      $region15: #{tpu_custom_call.1} parent=5 // pred_region
        // Predicated region
        $region17: #{tpu_custom_call.1} parent=15 // pred_check
          %p140 = pneg %p57
        $region18: #{tpu_custom_call.1} parent=15 // pred_check_branch
          %142 = sbr.rel (%p140) target = $region20
        $region19: #{tpu_custom_call.1} parent=15 // pred_region
          %s143 = sand.u32 %s47, 1
          %s144 = scalar_lea.sflag [#allocation4], %s143
          %s145 = sand.u32 %s47, 1
          %s146 = smul.addr %s145, 6
          %s147 = scalar_lea.vmem [#allocation3], %s146
          %s148 = sadd.s32 %s22, %s23
          %150 = vsyncadd %s144, 0
          %s151 = smul.addr %s21, 3
          %s152 = sadd.s32 %s148, %s151
          %s153 = smul.addr %s152, 2
          %s154 = scalar_lea.hbm %s0, %s153
          %s155 = sshll.u32 %s154, 4
          %s156 = int_to_ptr.hbm [resolvable:$true] %s155
          %s157 = sshll.u32 %s147, 4
          %s158 = int_to_ptr.vmem [resolvable:$true] %s157
          %163 = dma.hbm_to_vmem [thread:$0]  %s156, 96, %s158, %s144, 32, 32, 2
        $region20: #{tpu_custom_call.1} parent=15 // pred_fallthru
          _
        // Predicated region
        $region21: #{tpu_custom_call.1} parent=15 // pred_check
          %p164 = pneg %p87
        $region22: #{tpu_custom_call.1} parent=15 // pred_check_branch
          %166 = sbr.rel (%p164) target = $region24
        $region23: #{tpu_custom_call.1} parent=15 // pred_region
          %s167 = sand.u32 %s77, 1
          %s168 = scalar_lea.sflag [#allocation6], %s167
          %s169 = sand.u32 %s77, 1
          %s170 = smul.addr %s169, 2
          %s171 = scalar_lea.vmem [#allocation5], %s170
          %s172 = sadd.s32 %s22, %s23
          %174 = vsyncadd %s168, 0
          %s175 = sadd.s32 %s172, %s21
          %s176 = smul.addr %s175, 2
          %s177 = scalar_lea.hbm %s1, %s176
          %s179 = sshll.u32 %s177, 4
          %s180 = int_to_ptr.hbm [resolvable:$true] %s179
          %s181 = sshll.u32 %s171, 4
          %s182 = int_to_ptr.vmem [resolvable:$true] %s181
          %184 = dma.hbm_to_vmem [thread:$0]  %s180, 32, %s182, %s168
        $region24: #{tpu_custom_call.1} parent=15 // pred_fallthru
          _
      $region16: #{tpu_custom_call.1} parent=5 // pred_fallthru
        _
      %p185 = scmp.le.s32.totalorder 1, %s14
      %p186 = scmp.lt.s32.totalorder %s14, 3
      %p187 = pnand %p185, %p186
      %p188 = pneg %p187
      // Predicated region
      $region25: #{tpu_custom_call.1} parent=5 // pred_check
        _
      $region26: #{tpu_custom_call.1} parent=5 // pred_check_branch
        %190 = sbr.rel (%p187) target = $region28
      $region27: #{tpu_custom_call.1} parent=5 // pred_region
        %s191 = ssub.s32 %s14, 1
        %s192 = sand.u32 %s50, 1
        %s193 = scalar_lea.sflag [#allocation4], %s192
        %s194 = sand.u32 %s50, 1
        %s195 = smul.addr %s194, 6
        %s196 = scalar_lea.vmem [#allocation3], %s195
        // Predicated region
        $region29: #{tpu_custom_call.1} parent=27 // pred_check
          %p197 = pneg %p63
        $region30: #{tpu_custom_call.1} parent=27 // pred_check_branch
          %199 = sbr.rel (%p197) target = $region32
        $region31: #{tpu_custom_call.1} parent=27 // pred_region
          %201 = dma.done %s193, 96
        $region32: #{tpu_custom_call.1} parent=27 // pred_fallthru
          _
        %s202 = sand.u32 %s80, 1
        %s203 = scalar_lea.sflag [#allocation6], %s202
        %s204 = sand.u32 %s80, 1
        %s205 = smul.addr %s204, 2
        %s206 = scalar_lea.vmem [#allocation5], %s205
        // Predicated region
        $region33: #{tpu_custom_call.1} parent=27 // pred_check
          %p207 = pneg %p93
        $region34: #{tpu_custom_call.1} parent=27 // pred_check_branch
          %209 = sbr.rel (%p207) target = $region36
        $region35: #{tpu_custom_call.1} parent=27 // pred_region
          %211 = dma.done %s203, 32
        $region36: #{tpu_custom_call.1} parent=27 // pred_fallthru
          _
        %s212 = sand.u32 %s50, 1
        %s213 = scalar_lea.sflag [#allocation4], %s212
        %s214 = sand.u32 %s50, 1
        %s215 = smul.addr %s214, 6
        %s216 = scalar_lea.vmem [#allocation3], %s215
        %p217 = pneg %p63
        %p218 = pneg %p60
        %s219 = sand.u32 %s80, 1
        %s220 = scalar_lea.sflag [#allocation6], %s219
        %s221 = sand.u32 %s80, 1
        %s222 = smul.addr %s221, 2
        %s223 = scalar_lea.vmem [#allocation5], %s222
        %p224 = pneg %p93
        %p225 = pneg %p90
        %p226 = pneg %p121
        %p227 = pneg %p118
        %p228 = scmp.lt.s32.totalorder %s24, 1
        %s229 = scalar_select %p228, %s24, 1
        %p230 = scmp.lt.s32.totalorder %s25, 0
        %s231 = scalar_select %p230, %s25, 0
        %s232 = sadd.s32 %s231, %s229
        %s233 = scalar_lea.vmem %s2, %s232
        %s234 = sadd.s32 %s25, %s26
        %s235 = sadd.s32 %s25, %s26
        %p236 = scmp.lt.s32.totalorder %s24, 1
        %s237 = scalar_select %p236, %s24, 1
        %p238 = scmp.lt.s32.totalorder %s25, 0
        %s239 = scalar_select %p238, %s25, 0
        %s240 = sadd.s32 %s239, %s237
        %s241 = scalar_lea.vmem %s2, %s240
        %p242 = scmp.eq.s32.totalorder %s26, 0
        // Predicated region
        $region37: #{tpu_custom_call.1} parent=27 // pred_check
          %p243 = pneg %p242
        $region38: #{tpu_custom_call.1} parent=27 // pred_check_branch
          %245 = sbr.rel (%p243) target = $region40
        $region39: #{tpu_custom_call.1} parent=27 // pred_region
          %246 = vst [vmem:[#allocation2] sm:$0x3] 0.0
        $region40: #{tpu_custom_call.1} parent=27 // pred_fallthru
          _
        %v247 = vld [vmem:[%s206] sm:$0x3]
        %v248 = vld [vmem:[%s196] sm:$0x3]
        %s249 = scalar_lea.vmem %s196, 2 [#allocation3]
        %v250 = vld [vmem:[%s249] sm:$0x3]
        %s251 = scalar_lea.vmem %s196, 4 [#allocation3]
        %v252 = vld [vmem:[%s251] sm:$0x3]
        %v253 = vmax.f32 %v248, %v250
        %v254 = vmax.f32 %v253, %v252
        %v255 = vsub.f32 %v248, %v254
        %v256 = vsub.f32 %v250, %v254
        %v257 = vsub.f32 %v252, %v254
        %v258 = vmul.f32 %v255, 1.442695
        %v259 = vpow.pop %v258
        %v260 = vmul.f32 %v256, 1.442695
        %v261 = vpow.pop %v260
        %v262 = vmul.f32 %v257, 1.442695
        %v263 = vpow.pop %v262
        %v264 = vadd.f32 %v259, %v261
        %v265 = vadd.f32 %v264, %v263
        %vm266 = vcmp.eq.s32.totalorder %v247, 0
        %vm267 = vcmp.eq.s32.totalorder %v247, 1
        %v268 = vsel %vm267, %v256, %v257
        %v269 = vsel %vm267, %v261, %v263
        %v270 = vsel %vm266, %v255, %v268
        %v271 = vsel %vm266, %v259, %v269
        %v272 = vsel %vm266, 0.25, 0.75
        %v273 = vlog2.pop %v265
        %v274 = vmul.f32 %v273, 0.6931472
        %v275 = vsub.f32 %v270, %v274
        %v276 = vrcp.pop %v265
        %v277 = vmul.f32 %v265, %v276
        %v278 = vsub.f32 1.0, %v277
        %v279 = vmul.f32 %v276, %v278
        %v280 = vadd.f32 %v276, %v279
        %vm281 = vweird.f32 %v265
        %vm282 = vweird.f32 %v276
        %vm283 = vmor %vm281, %vm282
        %v284 = vsel %vm283, %v276, %v280
        %v285 = vand.u32 2147483647, %v265
        %vm286 = vcmp.eq.f32.partialorder %v285, 8.507059e+37
        %v287 = vand.u32 %v265, 2147483648
        %v288 = vor.u32 1.1754944e-38, %v287
        %v289 = vsel %vm286, %v288, %v284
        %v290 = vmul.f32 %v271, %v289
        %v291 = vsub.f32 1.0, %v290
        %v292 = vmul.f32 %v291, %v291
        %v293 = vsub.f32 0.0, %v272
        %v294 = vmul.f32 %v293, %v292
        %v295 = vmul.f32 %v294, %v275
        %v296 = vld [vmem:[#allocation2] sm:$0x3]
        %v297 = vadd.f32 %v296, %v295
        %298 = vst [vmem:[#allocation2] sm:$0x3] %v297
        // Predicated region
        $region41: #{tpu_custom_call.1} parent=27 // pred_check
          %p299 = pneg %p242
        $region42: #{tpu_custom_call.1} parent=27 // pred_check_branch
          %301 = sbr.rel (%p299) target = $region44
        $region43: #{tpu_custom_call.1} parent=27 // pred_region
          %v302 = vld [vmem:[#allocation2] sm:$0x3]
          %vm303 = vcmask 1041408
          %v304 = vsel %vm303, %v302, 0.0
          %305 = vadd.xlane.f32.xlu0 %v304
          %v306 = vpop.xlane.xlu0 %305
          %v307 = vrot.slane %v306, 4
          %v308 = vadd.f32 %v306, %v307
          %v309 = vrot.slane %v308, 2
          %v310 = vadd.f32 %v308, %v309
          %v311 = vrot.slane %v310, 1
          %v312 = vadd.f32 %v310, %v311
          %s313 = vtos %v312
          %v314 = vstv %s313
          %vm315 = vcmask 0
          %316 = vst.msk [vmem:[%s241] sm:$0x1] %vm315, %v314
        $region44: #{tpu_custom_call.1} parent=27 // pred_fallthru
          _
        %p317 = scmp.lt.s32.totalorder %s24, 1
        %s318 = scalar_select %p317, %s24, 1
        %p319 = scmp.lt.s32.totalorder %s25, 0
        %s320 = scalar_select %p319, %s25, 0
        %s321 = sadd.s32 %s320, %s318
        %s322 = scalar_lea.vmem %s2, %s321
        // Predicated region
        $region45: #{tpu_custom_call.1} parent=27 // pred_check
          %p323 = pneg %p118
        $region46: #{tpu_custom_call.1} parent=27 // pred_check_branch
          %325 = sbr.rel (%p323) target = $region48
        $region47: #{tpu_custom_call.1} parent=27 // pred_region
          _
        $region48: #{tpu_custom_call.1} parent=27 // pred_fallthru
          _
      $region28: #{tpu_custom_call.1} parent=5 // pred_fallthru
        _
      %p326 = scmp.le.s32.totalorder 2, %s14
      // Predicated region
      $region49: #{tpu_custom_call.1} parent=5 // pred_check
        %p327 = pneg %p326
      $region50: #{tpu_custom_call.1} parent=5 // pred_check_branch
        %329 = sbr.rel (%p327) target = $region52
      $region51: #{tpu_custom_call.1} parent=5 // pred_region
        %s330 = ssub.s32 %s14, 2
        // Predicated region
        $region53: #{tpu_custom_call.1} parent=51 // pred_check
          %p331 = pneg %p124
        $region54: #{tpu_custom_call.1} parent=51 // pred_check_branch
          %333 = sbr.rel (%p331) target = $region56
        $region55: #{tpu_custom_call.1} parent=51 // pred_region
          %p334 = scmp.lt.s32.totalorder %s27, 1
          %s335 = scalar_select %p334, %s27, 1
          %p336 = scmp.lt.s32.totalorder %s28, 0
          %s337 = scalar_select %p336, %s28, 0
          %s338 = sadd.s32 %s337, %s335
          %s339 = scalar_lea.vmem %s2, %s338
        $region56: #{tpu_custom_call.1} parent=51 // pred_fallthru
          _
      $region52: #{tpu_custom_call.1} parent=5 // pred_fallthru
        _
    $region6: #{tpu_custom_call.1} parent=1 // loop_footer
      %s18 = sadd.s32 1, %s14
    $region7: #{tpu_custom_call.1} parent=1 // loop_footer_branch
      %13 = sbr.rel target = $region3
    $region8: #{tpu_custom_call.1} parent=1 // loop_exit
      _
    %340 = vsyncpa [#allocation4], 1
    %s341 = scalar_lea.sflag [#allocation4], 1
    %342 = vsyncpa %s341, 1
    %343 = vsyncpa [#allocation6], 1
    %s344 = scalar_lea.sflag [#allocation6], 1
    %345 = vsyncpa %s344, 1

</llo_original>
